<compile_context>
chip_gen: v7x
topology: tpu7x:2x2x1
jax: 0.10.0
libtpu: 0.0.40
codegen_flags: <defaults>
</compile_context>

<pallas_src>
import functools

import jax
import jax.numpy as jnp
from jax.experimental import pallas as pl
from jax.experimental.pallas import tpu as pltpu

INPUT_SIZE = 784
HIDDEN_SIZE = 100
NUM_CLASSES = 10

HID_PAD = 128      # hidden 100 -> 128 lanes
OUT_PAD = 128      # classes 10 -> 128 lanes (unmasked lane-dense stores)
MAX_BATCH_TILE = 2048


def _round_up(x, m):
    return (x + m - 1) // m * m


def _choose_batch_tile(batch):
    """Batch-tile heuristic: large tiles to amortize per-step overhead, >=2
    grid steps for v7x megacore on mid/large batches, <~10% padding waste."""
    bp8 = _round_up(batch, 8)
    if bp8 <= MAX_BATCH_TILE:
        if bp8 >= 512:
            return _round_up((bp8 + 1) // 2, 8)   # two grid steps (megacore)
        return bp8                                 # single small step
    tile = MAX_BATCH_TILE
    while tile > 128 and _round_up(bp8, tile) - bp8 > max(bp8 // 10, 8):
        tile //= 2
    return tile


def mlp_kernel(x_ref, w1_ref, b1_ref, w2_ref, b2_ref, out_ref):
    # Layer 1: cast the f32 x tile to bf16 (VPU, hidden under the DMA), MXU
    # matmul with f32 accumulation, bias + ReLU.
    x = x_ref[...].astype(jnp.bfloat16)
    h = jnp.dot(x, w1_ref[...], preferred_element_type=jnp.float32)
    h = jnp.maximum(h + b1_ref[...], 0.0)              # (TB,128) + (1,128)
    # Layer 2: bf16 feed, f32 accumulation, bf16 writeback.
    o = jnp.dot(h.astype(jnp.bfloat16), w2_ref[...],
                preferred_element_type=jnp.float32)
    out_ref[...] = (o + b2_ref[...]).astype(out_ref.dtype)


@functools.partial(jax.jit, static_argnames=("batch_tile",))
def _forward_impl(x, w1_p, b1_p, w2_p, b2_p, *, batch_tile):
    batch = x.shape[0]
    bp = _round_up(batch, batch_tile)
    x = x.astype(jnp.float32)
    if bp != batch:                                    # pad only when needed
        x = jnp.pad(x, ((0, bp - batch), (0, 0)))

    grid = (bp // batch_tile,)
    flops = 2 * bp * (INPUT_SIZE * HID_PAD + HID_PAD * OUT_PAD)
    bytes_accessed = (
        bp * INPUT_SIZE * 4                            # x (f32)
        + w1_p.size * 2 + b1_p.size * 4                # layer-1 params
        + w2_p.size * 2 + b2_p.size * 4                # layer-2 params
        + bp * OUT_PAD * 2)                            # logits (bf16)

    out_p = pl.pallas_call(
        mlp_kernel,
        out_shape=jax.ShapeDtypeStruct((bp, OUT_PAD), jnp.bfloat16),
        grid_spec=pltpu.PrefetchScalarGridSpec(
            num_scalar_prefetch=0,
            grid=grid,
            in_specs=[
                # x: tiled over batch, auto double-buffered by the pipeline.
                pl.BlockSpec((batch_tile, INPUT_SIZE), lambda i: (i, 0)),
                # Params: constant block index -> DMA'd once, stay resident.
                pl.BlockSpec((INPUT_SIZE, HID_PAD), lambda i: (0, 0)),
                pl.BlockSpec((1, HID_PAD), lambda i: (0, 0)),
                pl.BlockSpec((HID_PAD, OUT_PAD), lambda i: (0, 0)),
                pl.BlockSpec((1, OUT_PAD), lambda i: (0, 0)),
            ],
            out_specs=pl.BlockSpec((batch_tile, OUT_PAD), lambda i: (i, 0)),
        ),
        compiler_params=pltpu.CompilerParams(
            # Batch tiles are independent -> shard across TCs on v7x megacore.
            dimension_semantics=("parallel",),
            # TB=2048 f32 x double-buffered (~12 MiB) + outputs exceeds v5e's
            # 16 MiB default scoped VMEM; stay well under physical on all gens.
            vmem_limit_bytes=40 * 1024 * 1024,
        ),
        cost_estimate=pl.CostEstimate(
            flops=flops, transcendentals=0, bytes_accessed=bytes_accessed),
    )(x, w1_p, b1_p, w2_p, b2_p)

    return out_p[:batch, :NUM_CLASSES].astype(jnp.float32)


def prep_params(w1, b1, w2, b2):
    """One-time param prep (hoisted out of the forward path): pad to
    lane-aligned shapes, weights in bf16, biases in f32. Zero padding is
    exact: ReLU(0)=0 and zero W2 rows contribute nothing."""
    w1_p = jnp.zeros((INPUT_SIZE, HID_PAD), jnp.bfloat16)
    w1_p = w1_p.at[:, :HIDDEN_SIZE].set(w1.astype(jnp.bfloat16))
    b1_p = jnp.zeros((1, HID_PAD), jnp.float32)
    b1_p = b1_p.at[:, :HIDDEN_SIZE].set(b1.reshape(1, -1).astype(jnp.float32))
    w2_p = jnp.zeros((HID_PAD, OUT_PAD), jnp.bfloat16)
    w2_p = w2_p.at[:HIDDEN_SIZE, :NUM_CLASSES].set(w2.astype(jnp.bfloat16))
    b2_p = jnp.zeros((1, OUT_PAD), jnp.float32)
    b2_p = b2_p.at[:, :NUM_CLASSES].set(b2.reshape(1, -1).astype(jnp.float32))
    return w1_p, b1_p, w2_p, b2_p


def neural_net_forward(x, params):
    """x: (B, 784) f32 -> (B, 10) f32 logits. `params` from prep_params()."""
    batch_tile = _choose_batch_tile(x.shape[0])
    return _forward_impl(x, *params, batch_tile=batch_tile)


def init_params(key):
    """Deterministic init mimicking PyTorch nn.Linear (uniform +/- 1/sqrt(fan_in))."""
    k1, k2, k3, k4 = jax.random.split(key, 4)
    bound1 = 1.0 / jnp.sqrt(INPUT_SIZE)
    bound2 = 1.0 / jnp.sqrt(HIDDEN_SIZE)
    w1 = jax.random.uniform(k1, (INPUT_SIZE, HIDDEN_SIZE), jnp.float32, -bound1, bound1)
    b1 = jax.random.uniform(k2, (1, HIDDEN_SIZE), jnp.float32, -bound1, bound1)
    w2 = jax.random.uniform(k3, (HIDDEN_SIZE, NUM_CLASSES), jnp.float32, -bound2, bound2)
    b2 = jax.random.uniform(k4, (1, NUM_CLASSES), jnp.float32, -bound2, bound2)
    return w1, b1, w2, b2


if __name__ == "__main__":
    key = jax.random.PRNGKey(0)
    kx, kp = jax.random.split(key)
    batch = 8
    x = jax.random.normal(kx, (batch, INPUT_SIZE), jnp.float32)
    w1, b1, w2, b2 = init_params(kp)

    params = prep_params(w1, b1, w2, b2)   # done once, outside the call path
    out = neural_net_forward(x, params)
    out = jax.block_until_ready(out)

    # Reference in plain JAX, matching the kernel's numerics (bf16 feeds,
    # f32 accumulation, bf16 logit writeback).
    x_r = x.astype(jnp.bfloat16).astype(jnp.float32)
    w1_r = w1.astype(jnp.bfloat16).astype(jnp.float32)
    w2_r = w2.astype(jnp.bfloat16).astype(jnp.float32)
    h_r = jnp.maximum(x_r @ w1_r + b1, 0.0)
    ref = h_r.astype(jnp.bfloat16).astype(jnp.float32) @ w2_r + b2
    ref = ref.astype(jnp.bfloat16).astype(jnp.float32)

    assert out.shape == (batch, NUM_CLASSES)
    assert jnp.allclose(out, ref, atol=2e-2, rtol=2e-2), (
        float(jnp.max(jnp.abs(out - ref))))

    print("KERNEL_OK")
</pallas_src>

<mosaic_0001>
module attributes {stable_mosaic.version = 11 : i64} {
  func.func @mlp_kernel(%arg0: i32, %arg1: memref<8x784xf32, #tpu.memory_space<vmem>>, %arg2: memref<784x128xbf16, #tpu.memory_space<vmem>>, %arg3: memref<1x128xf32, #tpu.memory_space<vmem>>, %arg4: memref<128x128xbf16, #tpu.memory_space<vmem>>, %arg5: memref<1x128xf32, #tpu.memory_space<vmem>>, %arg6: memref<8x128xbf16, #tpu.memory_space<vmem>>) attributes {dimension_semantics = [#tpu.dimension_semantics<parallel>], iteration_bounds = array<i64: 1>, scalar_prefetch = 0 : i64, scratch_operands = 0 : i64, tpu.core_type = #tpu.core_type<tc>, window_params = [{transform_indices = @transform_0, window_bounds = array<i64: 8, 784>}, {pipeline_mode = #tpu.pipeline_mode<synchronous>, transform_indices = @transform_1, window_bounds = array<i64: 784, 128>}, {pipeline_mode = #tpu.pipeline_mode<synchronous>, transform_indices = @transform_2, window_bounds = array<i64: 1, 128>}, {pipeline_mode = #tpu.pipeline_mode<synchronous>, transform_indices = @transform_3, window_bounds = array<i64: 128, 128>}, {pipeline_mode = #tpu.pipeline_mode<synchronous>, transform_indices = @transform_4, window_bounds = array<i64: 1, 128>}, {transform_indices = @transform_5, window_bounds = array<i64: 8, 128>}]} {
    %c0 = arith.constant 0 : index
    %c0_0 = arith.constant 0 : index
    %0 = vector.load %arg1[%c0, %c0_0] : memref<8x784xf32, #tpu.memory_space<vmem>>, vector<8x784xf32>
    %1 = arith.truncf %0 : vector<8x784xf32> to vector<8x784xbf16>
    %c0_1 = arith.constant 0 : index
    %c0_2 = arith.constant 0 : index
    %2 = vector.load %arg2[%c0_1, %c0_2] : memref<784x128xbf16, #tpu.memory_space<vmem>>, vector<784x128xbf16>
    %cst = arith.constant dense<0.000000e+00> : vector<8x128xf32>
    %3 = tpu.matmul %1, %2, %cst {dimension_numbers = #tpu.dot_dimension_numbers<[1], [0], [0], [1], [0, 0, 1, 1], [], []>} : vector<8x784xbf16>, vector<784x128xbf16>, vector<8x128xf32> -> vector<8x128xf32>
    %c0_3 = arith.constant 0 : index
    %c0_4 = arith.constant 0 : index
    %4 = vector.load %arg3[%c0_3, %c0_4] : memref<1x128xf32, #tpu.memory_space<vmem>>, vector<1x128xf32>
    %5 = vector.broadcast %4 : vector<1x128xf32> to vector<8x128xf32>
    %6 = arith.addf %3, %5 : vector<8x128xf32>
    %cst_5 = arith.constant 0.000000e+00 : f32
    %7 = vector.broadcast %cst_5 : f32 to vector<8x128xf32>
    %8 = arith.maximumf %6, %7 : vector<8x128xf32>
    %9 = arith.truncf %8 : vector<8x128xf32> to vector<8x128xbf16>
    %c0_6 = arith.constant 0 : index
    %c0_7 = arith.constant 0 : index
    %10 = vector.load %arg4[%c0_6, %c0_7] : memref<128x128xbf16, #tpu.memory_space<vmem>>, vector<128x128xbf16>
    %cst_8 = arith.constant dense<0.000000e+00> : vector<8x128xf32>
    %11 = tpu.matmul %9, %10, %cst_8 {dimension_numbers = #tpu.dot_dimension_numbers<[1], [0], [0], [1], [0, 0, 1, 1], [], []>} : vector<8x128xbf16>, vector<128x128xbf16>, vector<8x128xf32> -> vector<8x128xf32>
    %c0_9 = arith.constant 0 : index
    %c0_10 = arith.constant 0 : index
    %12 = vector.load %arg5[%c0_9, %c0_10] : memref<1x128xf32, #tpu.memory_space<vmem>>, vector<1x128xf32>
    %13 = vector.broadcast %12 : vector<1x128xf32> to vector<8x128xf32>
    %14 = arith.addf %11, %13 : vector<8x128xf32>
    %15 = arith.truncf %14 : vector<8x128xf32> to vector<8x128xbf16>
    %c0_11 = arith.constant 0 : index
    %c0_12 = arith.constant 0 : index
    %16 = vector.load %arg6[%c0_11, %c0_12] : memref<8x128xbf16, #tpu.memory_space<vmem>>, vector<8x128xbf16>
    tpu.vector_store %arg6[%c0_11, %c0_12], %15 {strides = array<i32>} : memref<8x128xbf16, #tpu.memory_space<vmem>>, vector<8x128xbf16>,
    return
  }
  func.func @transform_0(%arg0: i32) -> (i32, i32) {
    %c0_i32 = arith.constant 0 : i32
    %c0_i32_0 = arith.constant 0 : i32
    return %arg0, %c0_i32 : i32, i32
  }
  func.func @transform_1(%arg0: i32) -> (i32, i32) {
    %c0_i32 = arith.constant 0 : i32
    %c0_i32_0 = arith.constant 0 : i32
    %c0_i32_1 = arith.constant 0 : i32
    return %c0_i32, %c0_i32_0 : i32, i32
  }
  func.func @transform_2(%arg0: i32) -> (i32, i32) {
    %c0_i32 = arith.constant 0 : i32
    %c0_i32_0 = arith.constant 0 : i32
    %c0_i32_1 = arith.constant 0 : i32
    return %c0_i32, %c0_i32_0 : i32, i32
  }
  func.func @transform_3(%arg0: i32) -> (i32, i32) {
    %c0_i32 = arith.constant 0 : i32
    %c0_i32_0 = arith.constant 0 : i32
    %c0_i32_1 = arith.constant 0 : i32
    return %c0_i32, %c0_i32_0 : i32, i32
  }
  func.func @transform_4(%arg0: i32) -> (i32, i32) {
    %c0_i32 = arith.constant 0 : i32
    %c0_i32_0 = arith.constant 0 : i32
    %c0_i32_1 = arith.constant 0 : i32
    return %c0_i32, %c0_i32_0 : i32, i32
  }
  func.func @transform_5(%arg0: i32) -> (i32, i32) {
    %c0_i32 = arith.constant 0 : i32
    %c0_i32_0 = arith.constant 0 : i32
    return %arg0, %c0_i32 : i32, i32
  }
}

</mosaic_0001>

<llo_original>
// kernel: _forward_impl.1
$region0: #{_forward_impl.1}
  #allocation0 [shape = 'u32[]', space=smem, size = 0x4, offset = 0x4, fixed_abs, tag = 'smem constant byte address 0x4 - core index']
  #allocation1 [shape = 'u32[144,128]{1,0:T(1,128)}', space=vmem, size = 0x12000, scoped, tag = 'internal scratch']
  %s0 = inlined_call_operand.hbm [shape: f32[8,784], index: 0, kind: input, shape index: {}]
  %s1 = inlined_call_operand.hbm [shape: bf16[784,128], index: 1, kind: input, shape index: {}]
  %s2 = inlined_call_operand.vmem [shape: f32[1,128], index: 2, kind: input, shape index: {}]
  %s3 = inlined_call_operand.hbm [shape: bf16[128,128], index: 3, kind: input, shape index: {}]
  %s4 = inlined_call_operand.vmem [shape: f32[1,128], index: 4, kind: input, shape index: {}]
  %s5 = inlined_call_operand.vmem [shape: bf16[8,128], index: 5, kind: output, shape index: {}]
  %s6 = sld [smem:[#allocation0]]
  $region42: #{_forward_impl.1} parent=0
    _
  %s8 = ssub.s32 1, %s6
  %s9 = scalar_select 0, %s8, %s6
  $region1: #{_forward_impl.1} parent=0
    #allocation2 [shape = 'u8[28672]{0}', space=vmem, size = 0x7000, scoped, tag = 'input window, operand 0, single buffered']
    #allocation3 [shape = 's32[1]{0}', space=sflag, size = 0x4, scoped, tag = 'scoped memory for _forward_impl.1']
    #allocation4 [shape = 'u8[200704]{0}', space=vmem, size = 0x31000, scoped, tag = 'input window, operand 1, single buffered']
    #allocation5 [shape = 's32[1]{0}', space=sflag, size = 0x4, scoped, tag = 'scoped memory for _forward_impl.1']
    #allocation6 [shape = 'u8[32768]{0}', space=vmem, size = 0x8000, scoped, tag = 'input window, operand 3, single buffered']
    %10 = vsyncpa [#allocation3], 0
    %11 = vsyncpa [#allocation5], 0
    // Predicated region
    $region2: #{_forward_impl.1} parent=1 // pred_check
      _
    $region3: #{_forward_impl.1} parent=1 // pred_check_branch
      %13 = sbr.rel (0) target = $region5
    $region4: #{_forward_impl.1} parent=1 // pred_region
      %s15 = ssub.s32 896, 896
      %16 = vsyncadd [#allocation3], %s15
      %s18 = sshll.u32 [#allocation2], 4
      %s19 = int_to_ptr.vmem [resolvable:$true] %s18
      %21 = dma.hbm_to_vmem [thread:$0]  %s0, 896, %s19, [#allocation3]
    $region5: #{_forward_impl.1} parent=1 // pred_fallthru
      _
    // Predicated region
    $region6: #{_forward_impl.1} parent=1 // pred_check
      _
    $region7: #{_forward_impl.1} parent=1 // pred_check_branch
      %23 = sbr.rel (0) target = $region9
    $region8: #{_forward_impl.1} parent=1 // pred_region
      %s25 = ssub.s32 6272, 6272
      %26 = vsyncadd [#allocation5], %s25
      %s27 = sshll.u32 [#allocation4], 4
      %s28 = int_to_ptr.vmem [resolvable:$true] %s27
      %33 = dma.hbm_to_vmem [thread:$0]  %s1, 6272, %s28, [#allocation5], 64, 64, 4
    $region9: #{_forward_impl.1} parent=1 // pred_fallthru
      _
    // Predicated region
    $region10: #{_forward_impl.1} parent=1 // pred_check
      _
    $region11: #{_forward_impl.1} parent=1 // pred_check_branch
      %35 = sbr.rel (0) target = $region13
    $region12: #{_forward_impl.1} parent=1 // pred_region
      _
    $region13: #{_forward_impl.1} parent=1 // pred_fallthru
      _
    // Predicated region
    $region14: #{_forward_impl.1} parent=1 // pred_check
      _
    $region15: #{_forward_impl.1} parent=1 // pred_check_branch
      %37 = sbr.rel (0) target = $region17
    $region16: #{_forward_impl.1} parent=1 // pred_region
      %s39 = ssub.s32 1024, 1024
      %40 = vsyncadd [#allocation5], %s39
      %s41 = sshll.u32 [#allocation6], 4
      %s42 = int_to_ptr.vmem [resolvable:$true] %s41
      %47 = dma.hbm_to_vmem [thread:$0]  %s3, 1024, %s42, [#allocation5], 64, 64, 4
    $region17: #{_forward_impl.1} parent=1 // pred_fallthru
      _
    // Predicated region
    $region18: #{_forward_impl.1} parent=1 // pred_check
      _
    $region19: #{_forward_impl.1} parent=1 // pred_check_branch
      %49 = sbr.rel (0) target = $region21
    $region20: #{_forward_impl.1} parent=1 // pred_region
      _
    $region21: #{_forward_impl.1} parent=1 // pred_fallthru
      _
    // Predicated region
    $region22: #{_forward_impl.1} parent=1 // pred_check
      _
    $region23: #{_forward_impl.1} parent=1 // pred_check_branch
      %51 = sbr.rel (0) target = $region25
    $region24: #{_forward_impl.1} parent=1 // pred_region
      %52 = dma.done [#allocation3], 896
    $region25: #{_forward_impl.1} parent=1 // pred_fallthru
      _
    // Predicated region
    $region26: #{_forward_impl.1} parent=1 // pred_check
      _
    $region27: #{_forward_impl.1} parent=1 // pred_check_branch
      %54 = sbr.rel (0) target = $region29
    $region28: #{_forward_impl.1} parent=1 // pred_region
      %55 = dma.done [#allocation5], 6272
    $region29: #{_forward_impl.1} parent=1 // pred_fallthru
      _
    // Predicated region
    $region30: #{_forward_impl.1} parent=1 // pred_check
      _
    $region31: #{_forward_impl.1} parent=1 // pred_check_branch
      %57 = sbr.rel (0) target = $region33
    $region32: #{_forward_impl.1} parent=1 // pred_region
      %58 = dma.done [#allocation5], 1024
    $region33: #{_forward_impl.1} parent=1 // pred_fallthru
      _
    %v60 = vld [vmem:[#allocation2] sm:$0xff]
    %v61 = vld [vmem:[#allocation2 + $0x8] sm:$0xff]
    %v62 = vld [vmem:[#allocation2 + $0x10] sm:$0xff]
    %v63 = vld [vmem:[#allocation2 + $0x18] sm:$0xff]
    %v64 = vld [vmem:[#allocation2 + $0x20] sm:$0xff]
    %v65 = vld [vmem:[#allocation2 + $0x28] sm:$0xff]
    %v66 = vld [vmem:[#allocation2 + $0x30] sm:$0xff]
    %v67 = vpack.c.bf16 %v60, %v60
    %v68 = vpack.c.bf16 %v61, %v61
    %v69 = vpack.c.bf16 %v62, %v62
    %v70 = vpack.c.bf16 %v63, %v63
    %v71 = vpack.c.bf16 %v64, %v64
    %v72 = vpack.c.bf16 %v65, %v65
    %v73 = vpack.c.bf16 %v66, %v66
    %v74 = vld [vmem:[#allocation4] sm:$0xf]
    %v75 = vld [vmem:[#allocation4 + $0x4] sm:$0xf]
    %v76 = vld [vmem:[#allocation4 + $0x8] sm:$0xf]
    %v77 = vld [vmem:[#allocation4 + $0xc] sm:$0xf]
    %v78 = vld [vmem:[#allocation4 + $0x10] sm:$0xf]
    %v79 = vld [vmem:[#allocation4 + $0x14] sm:$0xf]
    %v80 = vld [vmem:[#allocation4 + $0x18] sm:$0xf]
    %v81 = vld [vmem:[#allocation4 + $0x1c] sm:$0xf]
    %v82 = vld [vmem:[#allocation4 + $0x20] sm:$0xf]
    %v83 = vld [vmem:[#allocation4 + $0x24] sm:$0xf]
    %v84 = vld [vmem:[#allocation4 + $0x28] sm:$0xf]
    %v85 = vld [vmem:[#allocation4 + $0x2c] sm:$0xf]
    %v86 = vld [vmem:[#allocation4 + $0x30] sm:$0xf]
    %v87 = vld [vmem:[#allocation4 + $0x34] sm:$0xf]
    %v88 = vld [vmem:[#allocation4 + $0x38] sm:$0xf]
    %v89 = vld [vmem:[#allocation4 + $0x3c] sm:$0xf]
    %v90 = vld [vmem:[#allocation4 + $0x40] sm:$0xf]
    %v91 = vld [vmem:[#allocation4 + $0x44] sm:$0xf]
    %v92 = vld [vmem:[#allocation4 + $0x48] sm:$0xf]
    %v93 = vld [vmem:[#allocation4 + $0x4c] sm:$0xf]
    %v94 = vld [vmem:[#allocation4 + $0x50] sm:$0xf]
    %v95 = vld [vmem:[#allocation4 + $0x54] sm:$0xf]
    %v96 = vld [vmem:[#allocation4 + $0x58] sm:$0xf]
    %v97 = vld [vmem:[#allocation4 + $0x5c] sm:$0xf]
    %v98 = vld [vmem:[#allocation4 + $0x60] sm:$0xf]
    %v99 = vld [vmem:[#allocation4 + $0x64] sm:$0xf]
    %v100 = vld [vmem:[#allocation4 + $0x68] sm:$0xf]
    %v101 = vld [vmem:[#allocation4 + $0x6c] sm:$0xf]
    %v102 = vld [vmem:[#allocation4 + $0x70] sm:$0xf]
    %v103 = vld [vmem:[#allocation4 + $0x74] sm:$0xf]
    %v104 = vld [vmem:[#allocation4 + $0x78] sm:$0xf]
    %v105 = vld [vmem:[#allocation4 + $0x7c] sm:$0xf]
    %v106 = vld [vmem:[#allocation4 + $0x80] sm:$0xf]
    %v107 = vld [vmem:[#allocation4 + $0x84] sm:$0xf]
    %v108 = vld [vmem:[#allocation4 + $0x88] sm:$0xf]
    %v109 = vld [vmem:[#allocation4 + $0x8c] sm:$0xf]
    %v110 = vld [vmem:[#allocation4 + $0x90] sm:$0xf]
    %v111 = vld [vmem:[#allocation4 + $0x94] sm:$0xf]
    %v112 = vld [vmem:[#allocation4 + $0x98] sm:$0xf]
    %v113 = vld [vmem:[#allocation4 + $0x9c] sm:$0xf]
    %v114 = vld [vmem:[#allocation4 + $0xa0] sm:$0xf]
    %v115 = vld [vmem:[#allocation4 + $0xa4] sm:$0xf]
    %v116 = vld [vmem:[#allocation4 + $0xa8] sm:$0xf]
    %v117 = vld [vmem:[#allocation4 + $0xac] sm:$0xf]
    %v118 = vld [vmem:[#allocation4 + $0xb0] sm:$0xf]
    %v119 = vld [vmem:[#allocation4 + $0xb4] sm:$0xf]
    %v120 = vld [vmem:[#allocation4 + $0xb8] sm:$0xf]
    %v121 = vld [vmem:[#allocation4 + $0xbc] sm:$0xf]
    %v122 = vld [vmem:[#allocation4 + $0xc0] sm:$0xf]
    %v123 = vld [vmem:[#allocation4 + $0xc4] sm:$0xf]
    %v124 = vld [vmem:[#allocation4 + $0xc8] sm:$0xf]
    %v125 = vld [vmem:[#allocation4 + $0xcc] sm:$0xf]
    %v126 = vld [vmem:[#allocation4 + $0xd0] sm:$0xf]
    %v127 = vld [vmem:[#allocation4 + $0xd4] sm:$0xf]
    %v128 = vld [vmem:[#allocation4 + $0xd8] sm:$0xf]
    %v129 = vld [vmem:[#allocation4 + $0xdc] sm:$0xf]
    %v130 = vld [vmem:[#allocation4 + $0xe0] sm:$0xf]
    %v131 = vld [vmem:[#allocation4 + $0xe4] sm:$0xf]
    %v132 = vld [vmem:[#allocation4 + $0xe8] sm:$0xf]
    %v133 = vld [vmem:[#allocation4 + $0xec] sm:$0xf]
    %v134 = vld [vmem:[#allocation4 + $0xf0] sm:$0xf]
    %v135 = vld [vmem:[#allocation4 + $0xf4] sm:$0xf]
    %v136 = vld [vmem:[#allocation4 + $0xf8] sm:$0xf]
    %v137 = vld [vmem:[#allocation4 + $0xfc] sm:$0xf]
    %v138 = vld [vmem:[#allocation4 + $0x100] sm:$0xf]
    %v139 = vld [vmem:[#allocation4 + $0x104] sm:$0xf]
    %v140 = vld [vmem:[#allocation4 + $0x108] sm:$0xf]
    %v141 = vld [vmem:[#allocation4 + $0x10c] sm:$0xf]
    %v142 = vld [vmem:[#allocation4 + $0x110] sm:$0xf]
    %v143 = vld [vmem:[#allocation4 + $0x114] sm:$0xf]
    %v144 = vld [vmem:[#allocation4 + $0x118] sm:$0xf]
    %v145 = vld [vmem:[#allocation4 + $0x11c] sm:$0xf]
    %v146 = vld [vmem:[#allocation4 + $0x120] sm:$0xf]
    %v147 = vld [vmem:[#allocation4 + $0x124] sm:$0xf]
    %v148 = vld [vmem:[#allocation4 + $0x128] sm:$0xf]
    %v149 = vld [vmem:[#allocation4 + $0x12c] sm:$0xf]
    %v150 = vld [vmem:[#allocation4 + $0x130] sm:$0xf]
    %v151 = vld [vmem:[#allocation4 + $0x134] sm:$0xf]
    %v152 = vld [vmem:[#allocation4 + $0x138] sm:$0xf]
    %v153 = vld [vmem:[#allocation4 + $0x13c] sm:$0xf]
    %v154 = vld [vmem:[#allocation4 + $0x140] sm:$0xf]
    %v155 = vld [vmem:[#allocation4 + $0x144] sm:$0xf]
    %v156 = vld [vmem:[#allocation4 + $0x148] sm:$0xf]
    %v157 = vld [vmem:[#allocation4 + $0x14c] sm:$0xf]
    %v158 = vld [vmem:[#allocation4 + $0x150] sm:$0xf]
    %v159 = vld [vmem:[#allocation4 + $0x154] sm:$0xf]
    %v160 = vld [vmem:[#allocation4 + $0x158] sm:$0xf]
    %v161 = vld [vmem:[#allocation4 + $0x15c] sm:$0xf]
    %v162 = vld [vmem:[#allocation4 + $0x160] sm:$0xf]
    %v163 = vld [vmem:[#allocation4 + $0x164] sm:$0xf]
    %v164 = vld [vmem:[#allocation4 + $0x168] sm:$0xf]
    %v165 = vld [vmem:[#allocation4 + $0x16c] sm:$0xf]
    %v166 = vld [vmem:[#allocation4 + $0x170] sm:$0xf]
    %v167 = vld [vmem:[#allocation4 + $0x174] sm:$0xf]
    %v168 = vld [vmem:[#allocation4 + $0x178] sm:$0xf]
    %v169 = vld [vmem:[#allocation4 + $0x17c] sm:$0xf]
    %v170 = vld [vmem:[#allocation4 + $0x180] sm:$0xf]
    %v171 = vld [vmem:[#allocation4 + $0x184] sm:$0xf]
    %v172 = vld [vmem:[%s2] sm:$0x1]
    %v174 = vlaneseq
    %v175 = vshrl.u32 %v174, 7
    %v176 = vsub.s32 0, %v175
    %v177 = vrot.slane %v172, %v176
    %v277 = vunpack.c.l.b16 %v74
    %v278 = vunpack.c.l.b16 %v75
    %v279 = vunpack.c.l.b16 %v76
    %v280 = vunpack.c.l.b16 %v77
    %v281 = vunpack.c.l.b16 %v78
    %v282 = vunpack.c.l.b16 %v79
    %v283 = vunpack.c.l.b16 %v80
    %v284 = vunpack.c.l.b16 %v81
    %v285 = vunpack.c.l.b16 %v82
    %v286 = vunpack.c.l.b16 %v83
    %v287 = vunpack.c.l.b16 %v84
    %v288 = vunpack.c.l.b16 %v85
    %v289 = vunpack.c.l.b16 %v86
    %v290 = vunpack.c.l.b16 %v87
    %v291 = vunpack.c.l.b16 %v88
    %v292 = vunpack.c.l.b16 %v89
    %v293 = vunpack.c.l.b16 %v90
    %v294 = vunpack.c.l.b16 %v91
    %v295 = vunpack.c.l.b16 %v92
    %v296 = vunpack.c.l.b16 %v93
    %v297 = vunpack.c.l.b16 %v94
    %v298 = vunpack.c.l.b16 %v95
    %v299 = vunpack.c.l.b16 %v96
    %v300 = vunpack.c.l.b16 %v97
    %v301 = vunpack.c.l.b16 %v98
    %v302 = vunpack.c.l.b16 %v99
    %v303 = vunpack.c.l.b16 %v100
    %v304 = vunpack.c.l.b16 %v101
    %v305 = vunpack.c.l.b16 %v102
    %v306 = vunpack.c.l.b16 %v103
    %v307 = vunpack.c.l.b16 %v104
    %v308 = vunpack.c.l.b16 %v105
    %v309 = vunpack.c.l.b16 %v106
    %v310 = vunpack.c.l.b16 %v107
    %v311 = vunpack.c.l.b16 %v108
    %v312 = vunpack.c.l.b16 %v109
    %v313 = vunpack.c.l.b16 %v110
    %v314 = vunpack.c.l.b16 %v111
    %v315 = vunpack.c.l.b16 %v112
    %v316 = vunpack.c.l.b16 %v113
    %v317 = vunpack.c.l.b16 %v114
    %v318 = vunpack.c.l.b16 %v115
    %v319 = vunpack.c.l.b16 %v116
    %v320 = vunpack.c.l.b16 %v117
    %v321 = vunpack.c.l.b16 %v118
    %v322 = vunpack.c.l.b16 %v119
    %v323 = vunpack.c.l.b16 %v120
    %v324 = vunpack.c.l.b16 %v121
    %v325 = vunpack.c.l.b16 %v122
    %v326 = vunpack.c.l.b16 %v123
    %v327 = vunpack.c.l.b16 %v124
    %v328 = vunpack.c.l.b16 %v125
    %v329 = vunpack.c.l.b16 %v126
    %v330 = vunpack.c.l.b16 %v127
    %v331 = vunpack.c.l.b16 %v128
    %v332 = vunpack.c.l.b16 %v129
    %v333 = vunpack.c.l.b16 %v130
    %v334 = vunpack.c.l.b16 %v131
    %v335 = vunpack.c.l.b16 %v132
    %v336 = vunpack.c.l.b16 %v133
    %v337 = vunpack.c.l.b16 %v134
    %v338 = vunpack.c.l.b16 %v135
    %v339 = vunpack.c.l.b16 %v136
    %v340 = vunpack.c.l.b16 %v137
    %v341 = vunpack.c.l.b16 %v138
    %v342 = vunpack.c.l.b16 %v139
    %v343 = vunpack.c.l.b16 %v140
    %v344 = vunpack.c.l.b16 %v141
    %v345 = vunpack.c.l.b16 %v142
    %v346 = vunpack.c.l.b16 %v143
    %v347 = vunpack.c.l.b16 %v144
    %v348 = vunpack.c.l.b16 %v145
    %v349 = vunpack.c.l.b16 %v146
    %v350 = vunpack.c.l.b16 %v147
    %v351 = vunpack.c.l.b16 %v148
    %v352 = vunpack.c.l.b16 %v149
    %v353 = vunpack.c.l.b16 %v150
    %v354 = vunpack.c.l.b16 %v151
    %v355 = vunpack.c.l.b16 %v152
    %v356 = vunpack.c.l.b16 %v153
    %v357 = vunpack.c.l.b16 %v154
    %v358 = vunpack.c.l.b16 %v155
    %v359 = vunpack.c.l.b16 %v156
    %v360 = vunpack.c.l.b16 %v157
    %v361 = vunpack.c.l.b16 %v158
    %v362 = vunpack.c.l.b16 %v159
    %v363 = vunpack.c.l.b16 %v160
    %v364 = vunpack.c.l.b16 %v161
    %v365 = vunpack.c.l.b16 %v162
    %v366 = vunpack.c.l.b16 %v163
    %v367 = vunpack.c.l.b16 %v164
    %v368 = vunpack.c.l.b16 %v165
    %v369 = vunpack.c.l.b16 %v166
    %v370 = vunpack.c.l.b16 %v167
    %v371 = vunpack.c.l.b16 %v168
    %v372 = vunpack.c.l.b16 %v169
    %v373 = vunpack.c.l.b16 %v170
    %v374 = vunpack.c.l.b16 %v171
    %v375 = vpack.c.b16 %v278, %v277
    %v376 = vpack.c.b16 %v280, %v279
    %v377 = vpack.c.b16 %v282, %v281
    %v378 = vpack.c.b16 %v284, %v283
    %v379 = vpack.c.b16 %v286, %v285
    %v380 = vpack.c.b16 %v288, %v287
    %v381 = vpack.c.b16 %v290, %v289
    %v382 = vpack.c.b16 %v292, %v291
    %v383 = vpack.c.b16 %v294, %v293
    %v384 = vpack.c.b16 %v296, %v295
    %v385 = vpack.c.b16 %v298, %v297
    %v386 = vpack.c.b16 %v300, %v299
    %v387 = vpack.c.b16 %v302, %v301
    %v388 = vpack.c.b16 %v304, %v303
    %v389 = vpack.c.b16 %v306, %v305
    %v390 = vpack.c.b16 %v308, %v307
    %v391 = vpack.c.b16 %v310, %v309
    %v392 = vpack.c.b16 %v312, %v311
    %v393 = vpack.c.b16 %v314, %v313
    %v394 = vpack.c.b16 %v316, %v315
    %v395 = vpack.c.b16 %v318, %v317
    %v396 = vpack.c.b16 %v320, %v319
    %v397 = vpack.c.b16 %v322, %v321
    %v398 = vpack.c.b16 %v324, %v323
    %v399 = vpack.c.b16 %v326, %v325
    %v400 = vpack.c.b16 %v328, %v327
    %v401 = vpack.c.b16 %v330, %v329
    %v402 = vpack.c.b16 %v332, %v331
    %v403 = vpack.c.b16 %v334, %v333
    %v404 = vpack.c.b16 %v336, %v335
    %v405 = vpack.c.b16 %v338, %v337
    %v406 = vpack.c.b16 %v340, %v339
    %v407 = vpack.c.b16 %v342, %v341
    %v408 = vpack.c.b16 %v344, %v343
    %v409 = vpack.c.b16 %v346, %v345
    %v410 = vpack.c.b16 %v348, %v347
    %v411 = vpack.c.b16 %v350, %v349
    %v412 = vpack.c.b16 %v352, %v351
    %v413 = vpack.c.b16 %v354, %v353
    %v414 = vpack.c.b16 %v356, %v355
    %v415 = vpack.c.b16 %v358, %v357
    %v416 = vpack.c.b16 %v360, %v359
    %v417 = vpack.c.b16 %v362, %v361
    %v418 = vpack.c.b16 %v364, %v363
    %v419 = vpack.c.b16 %v366, %v365
    %v420 = vpack.c.b16 %v368, %v367
    %v421 = vpack.c.b16 %v370, %v369
    %v422 = vpack.c.b16 %v372, %v371
    %v423 = vpack.c.b16 %v374, %v373
    %vm473 = vcmask 130048
    %v475 = vsel %vm473, %v73, 0
    %477 = vmatprep.subr.bf16.mxu0 0
    %478 = vmatpush1.bf16.msra.mxu0 %v375
    %479 = vmatprep.subr.bf16.mxu0 0
    %480 = vmatpush1.bf16.msra.mxu0 %v376
    %481 = vmatprep.subr.bf16.mxu0 0
    %482 = vmatpush1.bf16.msra.mxu0 %v377
    %483 = vmatprep.subr.bf16.mxu0 0
    %484 = vmatpush1.bf16.msra.mxu0 %v378
    %485 = vmatprep.subr.bf16.mxu0 0
    %486 = vmatpush1.bf16.msra.mxu0 %v379
    %487 = vmatprep.subr.bf16.mxu0 0
    %488 = vmatpush1.bf16.msra.mxu0 %v380
    %489 = vmatprep.subr.bf16.mxu0 0
    %490 = vmatpush1.bf16.msra.mxu0 %v381
    %491 = vmatprep.subr.bf16.mxu0 0
    %492 = vmatpush1.bf16.msra.mxu0 %v382
    %493 = vmatprep.subr.bf16.mxu0 0
    %494 = vmatpush1.bf16.msra.mxu0 %v383
    %495 = vmatprep.subr.bf16.mxu0 0
    %496 = vmatpush1.bf16.msra.mxu0 %v384
    %497 = vmatprep.subr.bf16.mxu0 0
    %498 = vmatpush1.bf16.msra.mxu0 %v385
    %499 = vmatprep.subr.bf16.mxu0 0
    %500 = vmatpush1.bf16.msra.mxu0 %v386
    %501 = vmatprep.subr.bf16.mxu0 0
    %502 = vmatpush1.bf16.msra.mxu0 %v387
    %503 = vmatprep.subr.bf16.mxu0 0
    %504 = vmatpush1.bf16.msra.mxu0 %v388
    %505 = vmatprep.subr.bf16.mxu0 0
    %506 = vmatpush1.bf16.msra.mxu0 %v389
    %507 = vmatprep.subr.bf16.mxu0 0
    %508 = vmatpush1.bf16.msra.mxu0 %v390
    %509 = vmatprep.mubr.bf16.mxu0 %v68
    %510 = vmatmul.mubr.bf16.gmra.mrb[0].mxu0 %v67
    %v511 = vpop.f32.mrb[0].mxu0
    %v512 = vadd.f32 %v177, %v511
    %v513 = vpop.f32.mrb[0].mxu0
    %v514 = vpop.f32.mrb[0].mxu0
    %v515 = vpop.f32.mrb[0].mxu0
    %516 = vdwg.mxu0
    %517 = vmatprep.subr.bf16.mxu0 0
    %518 = vmatpush1.bf16.msra.mxu0 %v391
    %519 = vmatprep.subr.bf16.mxu0 0
    %520 = vmatpush1.bf16.msra.mxu0 %v392
    %521 = vmatprep.subr.bf16.mxu0 0
    %522 = vmatpush1.bf16.msra.mxu0 %v393
    %523 = vmatprep.subr.bf16.mxu0 0
    %524 = vmatpush1.bf16.msra.mxu0 %v394
    %525 = vmatprep.subr.bf16.mxu0 0
    %526 = vmatpush1.bf16.msra.mxu0 %v395
    %527 = vmatprep.subr.bf16.mxu0 0
    %528 = vmatpush1.bf16.msra.mxu0 %v396
    %529 = vmatprep.subr.bf16.mxu0 0
    %530 = vmatpush1.bf16.msra.mxu0 %v397
    %531 = vmatprep.subr.bf16.mxu0 0
    %532 = vmatpush1.bf16.msra.mxu0 %v398
    %533 = vmatprep.subr.bf16.mxu0 0
    %534 = vmatpush1.bf16.msra.mxu0 %v399
    %535 = vmatprep.subr.bf16.mxu0 0
    %536 = vmatpush1.bf16.msra.mxu0 %v400
    %537 = vmatprep.subr.bf16.mxu0 0
    %538 = vmatpush1.bf16.msra.mxu0 %v401
    %539 = vmatprep.subr.bf16.mxu0 0
    %540 = vmatpush1.bf16.msra.mxu0 %v402
    %541 = vmatprep.subr.bf16.mxu0 0
    %542 = vmatpush1.bf16.msra.mxu0 %v403
    %543 = vmatprep.subr.bf16.mxu0 0
    %544 = vmatpush1.bf16.msra.mxu0 %v404
    %545 = vmatprep.subr.bf16.mxu0 0
    %546 = vmatpush1.bf16.msra.mxu0 %v405
    %547 = vmatprep.subr.bf16.mxu0 0
    %548 = vmatpush1.bf16.msra.mxu0 %v406
    %549 = vmatprep.mubr.bf16.mxu0 %v70
    %550 = vmatmul.mubr.bf16.gmra.mrb[0].mxu0 %v69
    %v551 = vpop.f32.mrb[0].mxu0
    %v552 = vadd.f32 %v512, %v551
    %v553 = vpop.f32.mrb[0].mxu0
    %v554 = vpop.f32.mrb[0].mxu0
    %v555 = vpop.f32.mrb[0].mxu0
    %556 = vdwg.mxu0
    %557 = vmatprep.subr.bf16.mxu0 0
    %558 = vmatpush1.bf16.msra.mxu0 %v407
    %559 = vmatprep.subr.bf16.mxu0 0
    %560 = vmatpush1.bf16.msra.mxu0 %v408
    %561 = vmatprep.subr.bf16.mxu0 0
    %562 = vmatpush1.bf16.msra.mxu0 %v409
    %563 = vmatprep.subr.bf16.mxu0 0
    %564 = vmatpush1.bf16.msra.mxu0 %v410
    %565 = vmatprep.subr.bf16.mxu0 0
    %566 = vmatpush1.bf16.msra.mxu0 %v411
    %567 = vmatprep.subr.bf16.mxu0 0
    %568 = vmatpush1.bf16.msra.mxu0 %v412
    %569 = vmatprep.subr.bf16.mxu0 0
    %570 = vmatpush1.bf16.msra.mxu0 %v413
    %571 = vmatprep.subr.bf16.mxu0 0
    %572 = vmatpush1.bf16.msra.mxu0 %v414
    %573 = vmatprep.subr.bf16.mxu0 0
    %574 = vmatpush1.bf16.msra.mxu0 %v415
    %575 = vmatprep.subr.bf16.mxu0 0
    %576 = vmatpush1.bf16.msra.mxu0 %v416
    %577 = vmatprep.subr.bf16.mxu0 0
    %578 = vmatpush1.bf16.msra.mxu0 %v417
    %579 = vmatprep.subr.bf16.mxu0 0
    %580 = vmatpush1.bf16.msra.mxu0 %v418
    %581 = vmatprep.subr.bf16.mxu0 0
    %582 = vmatpush1.bf16.msra.mxu0 %v419
    %583 = vmatprep.subr.bf16.mxu0 0
    %584 = vmatpush1.bf16.msra.mxu0 %v420
    %585 = vmatprep.subr.bf16.mxu0 0
    %586 = vmatpush1.bf16.msra.mxu0 %v421
    %587 = vmatprep.subr.bf16.mxu0 0
    %588 = vmatpush1.bf16.msra.mxu0 %v422
    %589 = vmatprep.mubr.bf16.mxu0 %v72
    %590 = vmatmul.mubr.bf16.gmra.mrb[0].mxu0 %v71
    %v591 = vpop.f32.mrb[0].mxu0
    %v592 = vadd.f32 %v552, %v591
    %v593 = vpop.f32.mrb[0].mxu0
    %v594 = vpop.f32.mrb[0].mxu0
    %v595 = vpop.f32.mrb[0].mxu0
    %596 = vdwg.mxu0
    %597 = vmatprep.subr.bf16.mxu0 0
    %598 = vmatpush1.bf16.msra.mxu0 %v423
    %599 = vmatprep.subr.bf16.mxu0 0
    %600 = vmatpush1.bf16.msra.mxu0 0
    %601 = vmatprep.subr.bf16.mxu0 0
    %602 = vmatpush1.bf16.msra.mxu0 0
    %603 = vmatprep.subr.bf16.mxu0 0
    %604 = vmatpush1.bf16.msra.mxu0 0
    %605 = vmatprep.subr.bf16.mxu0 0
    %606 = vmatpush1.bf16.msra.mxu0 0
    %607 = vmatprep.subr.bf16.mxu0 0
    %608 = vmatpush1.bf16.msra.mxu0 0
    %609 = vmatprep.subr.bf16.mxu0 0
    %610 = vmatpush1.bf16.msra.mxu0 0
    %611 = vmatprep.subr.bf16.mxu0 0
    %612 = vmatpush1.bf16.msra.mxu0 0
    %613 = vmatprep.subr.bf16.mxu0 0
    %614 = vmatpush1.bf16.msra.mxu0 0
    %615 = vmatprep.subr.bf16.mxu0 0
    %616 = vmatpush1.bf16.msra.mxu0 0
    %617 = vmatprep.subr.bf16.mxu0 0
    %618 = vmatpush1.bf16.msra.mxu0 0
    %619 = vmatprep.subr.bf16.mxu0 0
    %620 = vmatpush1.bf16.msra.mxu0 0
    %621 = vmatprep.subr.bf16.mxu0 0
    %622 = vmatpush1.bf16.msra.mxu0 0
    %623 = vmatprep.subr.bf16.mxu0 0
    %624 = vmatpush1.bf16.msra.mxu0 0
    %625 = vmatprep.subr.bf16.mxu0 0
    %626 = vmatpush1.bf16.msra.mxu0 0
    %627 = vmatprep.subr.bf16.mxu0 0
    %628 = vmatpush1.bf16.msra.mxu0 0
    %629 = vmatprep.mubr.bf16.mxu0 0
    %630 = vmatmul.mubr.bf16.gmra.mrb[0].mxu0 %v475
    %v631 = vpop.f32.mrb[0].mxu0
    %v632 = vadd.f32 %v592, %v631
    %v633 = vpop.f32.mrb[0].mxu0
    %v634 = vpop.f32.mrb[0].mxu0
    %v635 = vpop.f32.mrb[0].mxu0
    %636 = vdwg.mxu0
    %v637 = vmax.f32 %v632, 0.0
    %v638 = vpack.c.bf16 %v637, %v637
    %v639 = vld [vmem:[#allocation6] sm:$0xf]
    %v640 = vld [vmem:[#allocation6 + $0x4] sm:$0xf]
    %v641 = vld [vmem:[#allocation6 + $0x8] sm:$0xf]
    %v642 = vld [vmem:[#allocation6 + $0xc] sm:$0xf]
    %v643 = vld [vmem:[#allocation6 + $0x10] sm:$0xf]
    %v644 = vld [vmem:[#allocation6 + $0x14] sm:$0xf]
    %v645 = vld [vmem:[#allocation6 + $0x18] sm:$0xf]
    %v646 = vld [vmem:[#allocation6 + $0x1c] sm:$0xf]
    %v647 = vld [vmem:[#allocation6 + $0x20] sm:$0xf]
    %v648 = vld [vmem:[#allocation6 + $0x24] sm:$0xf]
    %v649 = vld [vmem:[#allocation6 + $0x28] sm:$0xf]
    %v650 = vld [vmem:[#allocation6 + $0x2c] sm:$0xf]
    %v651 = vld [vmem:[#allocation6 + $0x30] sm:$0xf]
    %v652 = vld [vmem:[#allocation6 + $0x34] sm:$0xf]
    %v653 = vld [vmem:[#allocation6 + $0x38] sm:$0xf]
    %v654 = vld [vmem:[#allocation6 + $0x3c] sm:$0xf]
    %v655 = vld [vmem:[%s4] sm:$0x1]
    %v657 = vlaneseq
    %v658 = vshrl.u32 %v657, 7
    %v659 = vsub.s32 0, %v658
    %v660 = vrot.slane %v655, %v659
    %v678 = vunpack.c.l.b16 %v639
    %v679 = vunpack.c.l.b16 %v640
    %v680 = vunpack.c.l.b16 %v641
    %v681 = vunpack.c.l.b16 %v642
    %v682 = vunpack.c.l.b16 %v643
    %v683 = vunpack.c.l.b16 %v644
    %v684 = vunpack.c.l.b16 %v645
    %v685 = vunpack.c.l.b16 %v646
    %v686 = vunpack.c.l.b16 %v647
    %v687 = vunpack.c.l.b16 %v648
    %v688 = vunpack.c.l.b16 %v649
    %v689 = vunpack.c.l.b16 %v650
    %v690 = vunpack.c.l.b16 %v651
    %v691 = vunpack.c.l.b16 %v652
    %v692 = vunpack.c.l.b16 %v653
    %v693 = vunpack.c.l.b16 %v654
    %v694 = vpack.c.b16 %v679, %v678
    %v695 = vpack.c.b16 %v681, %v680
    %v696 = vpack.c.b16 %v683, %v682
    %v697 = vpack.c.b16 %v685, %v684
    %v698 = vpack.c.b16 %v687, %v686
    %v699 = vpack.c.b16 %v689, %v688
    %v700 = vpack.c.b16 %v691, %v690
    %v701 = vpack.c.b16 %v693, %v692
    %710 = vmatprep.subr.bf16.mxu0 0
    %711 = vmatpush1.bf16.msra.mxu0 %v694
    %712 = vmatprep.subr.bf16.mxu0 0
    %713 = vmatpush1.bf16.msra.mxu0 %v695
    %714 = vmatprep.subr.bf16.mxu0 0
    %715 = vmatpush1.bf16.msra.mxu0 %v696
    %716 = vmatprep.subr.bf16.mxu0 0
    %717 = vmatpush1.bf16.msra.mxu0 %v697
    %718 = vmatprep.subr.bf16.mxu0 0
    %719 = vmatpush1.bf16.msra.mxu0 %v698
    %720 = vmatprep.subr.bf16.mxu0 0
    %721 = vmatpush1.bf16.msra.mxu0 %v699
    %722 = vmatprep.subr.bf16.mxu0 0
    %723 = vmatpush1.bf16.msra.mxu0 %v700
    %724 = vmatprep.subr.bf16.mxu0 0
    %725 = vmatpush1.bf16.msra.mxu0 %v701
    %726 = vmatprep.subr.bf16.mxu0 0
    %727 = vmatpush1.bf16.msra.mxu0 0
    %728 = vmatprep.subr.bf16.mxu0 0
    %729 = vmatpush1.bf16.msra.mxu0 0
    %730 = vmatprep.subr.bf16.mxu0 0
    %731 = vmatpush1.bf16.msra.mxu0 0
    %732 = vmatprep.subr.bf16.mxu0 0
    %733 = vmatpush1.bf16.msra.mxu0 0
    %734 = vmatprep.subr.bf16.mxu0 0
    %735 = vmatpush1.bf16.msra.mxu0 0
    %736 = vmatprep.subr.bf16.mxu0 0
    %737 = vmatpush1.bf16.msra.mxu0 0
    %738 = vmatprep.subr.bf16.mxu0 0
    %739 = vmatpush1.bf16.msra.mxu0 0
    %740 = vmatprep.subr.bf16.mxu0 0
    %741 = vmatpush1.bf16.msra.mxu0 0
    %742 = vmatprep.mubr.bf16.mxu0 0
    %743 = vmatmul.mubr.bf16.gmra.mrb[0].mxu0 %v638
    %v744 = vpop.f32.mrb[0].mxu0
    %v745 = vadd.f32 %v660, %v744
    %v746 = vpop.f32.mrb[0].mxu0
    %v747 = vpop.f32.mrb[0].mxu0
    %v748 = vpop.f32.mrb[0].mxu0
    %749 = vdwg.mxu0
    %v750 = vpack.c.bf16 %v745, %v745
    %751 = vst [vmem:[%s5] sm:$0xf] %v750
    // Predicated region
    $region34: #{_forward_impl.1} parent=1 // pred_check
      _
    $region35: #{_forward_impl.1} parent=1 // pred_check_branch
      %753 = sbr.rel (0) target = $region37
    $region36: #{_forward_impl.1} parent=1 // pred_region
      _
    $region37: #{_forward_impl.1} parent=1 // pred_fallthru
      _
    // Predicated region
    $region38: #{_forward_impl.1} parent=1 // pred_check
      _
    $region39: #{_forward_impl.1} parent=1 // pred_check_branch
      %755 = sbr.rel (0) target = $region41
    $region40: #{_forward_impl.1} parent=1 // pred_region
      _
    $region41: #{_forward_impl.1} parent=1 // pred_fallthru
      _
    %756 = vsyncpa [#allocation3], 1
    %757 = vsyncpa [#allocation5], 1

</llo_original>
